<compile_context>
chip_gen: v6e
topology: v6e:2x2x1
jax: 0.10.0
libtpu: 0.0.40
codegen_flags: <defaults>
</compile_context>

<pallas_src>
import functools

import jax
import jax.numpy as jnp
import numpy as np
from jax.experimental import pallas as pl
from jax.experimental.pallas import tpu as pltpu


ACTION_OBS_NAME_MAP = {
    "play_card": "card_obs",
    "use_skill": "skill_obs",
    "change_character": "character_obs",
}
HEAD_ORDER = ("play_card", "use_skill", "change_character")

_SLAB_WIDTH = 128   # lane-dense weight-slab width
_LANE = 128         # output slab padded to a multiple of this


def _vmem():
    return pl.BlockSpec(memory_space=pltpu.MemorySpace.VMEM)


# ------------------------------ fused kernel --------------------------------
def genshin_vac_kernel(obs_ref, wslab_ref, enc0_ref, enc1_ref, enc2_ref, out_ref,
                       *, offs, hid, n_act):
    """Critic + action-type head + all three ActionArgHeads in one fused body."""

    def w(name):  # static slice of the packed weight slab (sublane-aligned view + load)
        r0, nr, nc = offs[name]
        return wslab_ref[r0:r0 + nr, 0:nc]

    obs = obs_ref[...]                                                   # (B, H)
    batch = obs.shape[0]

    # critic + actor first layers fused:  obs @ [cw1 | aw1], ReLU
    h1 = jnp.dot(obs, w("w1"), preferred_element_type=jnp.float32) + w("b1")
    h1 = jnp.maximum(h1, 0.0)                                            # (B, 2H)
    # second layers fused through a block-diagonal weight: (B, 2H) @ (2H, 1+A)
    va = jnp.dot(h1, w("w2"), preferred_element_type=jnp.float32) + w("b2")   # (B, 1+A)
    logit = va[:, 1:1 + n_act]                                           # (B, A)

    # exact softmax over action types (approx reciprocal on a (B,1) operand buys nothing)
    m = jnp.max(logit, axis=-1, keepdims=True)
    e = jnp.exp(logit - m)
    prob = e / jnp.sum(e, axis=-1, keepdims=True)

    # all three query projections in one matmul:  prob @ [wq_card | wq_skill | wq_char]
    qcat = jnp.dot(prob, w("wq"), preferred_element_type=jnp.float32) + w("bq")   # (B, 3H)

    pieces = [va]                                # value | action-type logits, contiguous
    for i, enc_ref in enumerate((enc0_ref, enc1_ref, enc2_ref)):
        enc = enc_ref[...]                                               # (B*N_i, D_i)
        key2d = jnp.dot(enc, w(f"wk{i}"),
                        preferred_element_type=jnp.float32) + w(f"bk{i}")   # (B*N_i, H)

        # single-pass global mean / Bessel-corrected variance, folded into scalars
        cnt = key2d.shape[0] * key2d.shape[1]
        s1 = jnp.sum(key2d)
        s2 = jnp.sum(key2d * key2d)
        mean = s1 * (1.0 / cnt)
        var = (s2 - cnt * mean * mean) * (1.0 / (cnt - 1))
        inv_denom = 1.0 / (jnp.sqrt(var) + 1e-8)      # matches torch (key.std() + 1e-8)

        query = qcat[:, i * hid:(i + 1) * hid] + obs                     # (B, H)
        qsum = jnp.sum(query, axis=-1, keepdims=True)                    # (B, 1)

        # ONE MXU NT dot per head: (B,H) x (B*N,H)^T -> (B, B*N).
        #   q . ((key - mean)/denom) == (q . key - mean*sum(q)) / denom
        # applied uniformly; the wrapper reads only the block-diagonal strip of each row.
        full = jax.lax.dot_general(query, key2d, (((1,), (1,)), ((), ())),
                                   preferred_element_type=jnp.float32)
        pieces.append((full - mean * qsum) * inv_denom)

    used = sum(p.shape[1] for p in pieces)
    pad = out_ref.shape[1] - used
    if pad:
        pieces.append(jnp.zeros((batch, pad), jnp.float32))
    out_ref[...] = jnp.concatenate(pieces, axis=-1)   # single unmasked lane-dense store


# ------------------------------ host-side packing ----------------------------
def prepare_fused_params(p):
    """One-time host-side packing of every weight/bias into one (rows, 128) f32 slab."""
    hid = int(p["cw1"].shape[0])
    n_act = int(p["aw2"].shape[1])

    def cat(*xs, axis):
        return np.concatenate([np.asarray(x, np.float32) for x in xs], axis=axis)

    w1 = cat(p["cw1"], p["aw1"], axis=1)                                 # (H, 2H)
    b1 = cat(p["cb1"], p["ab1"], axis=1)                                 # (1, 2H)
    w2 = np.zeros((2 * hid, 1 + n_act), np.float32)                      # exact block-diag
    w2[:hid, 0:1] = np.asarray(p["cw2"], np.float32)
    w2[hid:, 1:] = np.asarray(p["aw2"], np.float32)
    b2 = cat(p["cb2"], p["ab2"], axis=1)                                 # (1, 1+A)
    wq = cat(*[p["arg_heads"][n]["wq"] for n in HEAD_ORDER], axis=1)     # (A, 3H)
    bq = cat(*[p["arg_heads"][n]["bq"] for n in HEAD_ORDER], axis=1)     # (1, 3H)

    sections = [("w1", w1), ("b1", b1), ("w2", w2), ("b2", b2), ("wq", wq), ("bq", bq)]
    for i, name in enumerate(HEAD_ORDER):
        hp = p["arg_heads"][name]
        sections.append((f"wk{i}", np.asarray(hp["wk"], np.float32)))
        sections.append((f"bk{i}", np.asarray(hp["bk"], np.float32).reshape(1, -1)))

    offs, chunks, row = {}, [], 0
    for name, arr in sections:
        r, c = arr.shape
        assert c <= _SLAB_WIDTH
        offs[name] = (row, r, c)
        padded = np.zeros((r, _SLAB_WIDTH), np.float32)
        padded[:, :c] = arr
        chunks.append(padded)
        row += r
        aligned = -(-row // 8) * 8            # keep every section start sublane-aligned
        if aligned > row:
            chunks.append(np.zeros((aligned - row, _SLAB_WIDTH), np.float32))
            row = aligned

    slab = jnp.asarray(np.concatenate(chunks, axis=0))
    meta = {"offs": offs, "hid": hid, "n_act": n_act}
    return slab, meta


def build_forward(meta):
    offs, hid, n_act = meta["offs"], meta["hid"], meta["n_act"]
    kernel = functools.partial(genshin_vac_kernel, offs=offs, hid=hid, n_act=n_act)

    @jax.jit
    def forward(obs_embedding, encoded_obs, weight_slab):
        batch = obs_embedding.shape[0]
        enc2d, n_ents = [], []
        for name in HEAD_ORDER:
            e = encoded_obs[ACTION_OBS_NAME_MAP[name]]
            n_ents.append(e.shape[1])
            enc2d.append(e.reshape(batch * e.shape[1], e.shape[2]))  # free XLA reshape

        used = 1 + n_act + batch * sum(n_ents)
        out_w = -(-used // _LANE) * _LANE

        # TODO(synk): for large batches add a leading grid axis over batch tiles with
        # dimension_semantics=("parallel",) so v7x's two TensorCores split the work.
        slab_out = pl.pallas_call(
            kernel,
            out_shape=jax.ShapeDtypeStruct((batch, out_w), jnp.float32),
            in_specs=[_vmem()] * 5,
            out_specs=_vmem(),
        )(obs_embedding, weight_slab, *enc2d)

        value = slab_out[:, 0]                        # RegressionHead 'pred' (squeezed)
        logit = slab_out[:, 1:1 + n_act]
        rows = jnp.arange(batch)
        action_args, off = {}, 1 + n_act
        for name, n in zip(HEAD_ORDER, n_ents):
            block = slab_out[:, off:off + batch * n].reshape(batch, batch, n)
            action_args[name] = block[rows, rows]     # own-batch block-diagonal gather
            off += batch * n
        return {"logit": {"action_type": logit, "action_args": action_args},
                "value": value}

    return forward


# --------------------------- pure-JAX reference ------------------------------
def _ref_forward(obs, encoded_obs, p):
    hc = jnp.maximum(obs @ p["cw1"] + p["cb1"], 0.0)
    value = (hc @ p["cw2"] + p["cb2"]).squeeze(-1)
    ha = jnp.maximum(obs @ p["aw1"] + p["ab1"], 0.0)
    logit = ha @ p["aw2"] + p["ab2"]
    prob = jax.nn.softmax(logit, axis=-1)
    args = {}
    for an, on in ACTION_OBS_NAME_MAP.items():
        hp = p["arg_heads"][an]
        key = encoded_obs[on] @ hp["wk"] + hp["bk"]
        mean = jnp.mean(key)
        std = jnp.sqrt(jnp.sum((key - mean) ** 2) / (key.size - 1))
        key = (key - mean) / (std + 1e-8)
        query = prob @ hp["wq"] + hp["bq"].reshape(1, -1) + obs
        args[an] = jnp.einsum("bh,bnh->bn", query, key)
    return {"logit": {"action_type": logit, "action_args": args}, "value": value}


# ---------------------------------- main -------------------------------------
if __name__ == "__main__":
    B = 8          # batch (>=8 fills all sublanes; raise per-call batch for throughput)
    H = 32         # obs_embedding_shape
    A = 8          # action_type_space.n
    ENC_SHAPES = {  # encoded_obs: (num entities, feature dim)
        "card_obs": (10, 24),
        "skill_obs": (4, 16),
        "character_obs": (3, 12),
    }

    key = jax.random.PRNGKey(0)
    ks = iter(jax.random.split(key, 64))

    def rnd(shape, scale=0.1):
        return (scale * jax.random.normal(next(ks), shape)).astype(jnp.float32)

    params = {
        # critic RegressionHead(H, 1, layer_num=1)
        "cw1": rnd((H, H)), "cb1": rnd((1, H)),
        "cw2": rnd((H, 1)), "cb2": rnd((1, 1)),
        # actor DiscreteHead(H, A, layer_num=1)
        "aw1": rnd((H, H)), "ab1": rnd((1, H)),
        "aw2": rnd((H, A)), "ab2": rnd((1, A)),
        "arg_heads": {},
    }
    for action_name, obs_name in ACTION_OBS_NAME_MAP.items():
        _, D = ENC_SHAPES[obs_name]
        params["arg_heads"][action_name] = {
            "wk": rnd((D, H)), "bk": rnd((1, 1, H)),   # W_k: Linear(D, H)
            "wq": rnd((A, H)), "bq": rnd((1, H)),      # W_q: Linear(A, H)
        }

    obs_embedding = rnd((B, H), scale=1.0)
    encoded_obs = {name: rnd((B,) + shp, scale=1.0)
                   for name, shp in ENC_SHAPES.items()}

    weight_slab, meta = prepare_fused_params(params)
    forward = build_forward(meta)
    out = forward(obs_embedding, encoded_obs, weight_slab)
    out = jax.block_until_ready(out)

    ref = _ref_forward(obs_embedding, encoded_obs, params)
    np.testing.assert_allclose(out["value"], ref["value"], rtol=1e-5, atol=1e-5)
    np.testing.assert_allclose(out["logit"]["action_type"],
                               ref["logit"]["action_type"], rtol=1e-5, atol=1e-5)
    # Exact softmax division + exact (folded) normalization: tolerance tightened from the
    # previous 1e-2 to 1e-4 (remaining delta is f32 matmul / single-pass-variance rounding).
    for an in ACTION_OBS_NAME_MAP:
        np.testing.assert_allclose(out["logit"]["action_args"][an],
                                   ref["logit"]["action_args"][an],
                                   rtol=1e-4, atol=1e-4)

    print("KERNEL_OK")
</pallas_src>

<mosaic_0001>
module attributes {stable_mosaic.version = 11 : i64} {
  func.func @genshin_vac_kernel(%arg0: memref<8x32xf32, #tpu.memory_space<vmem>>, %arg1: memref<208x128xf32, #tpu.memory_space<vmem>>, %arg2: memref<80x24xf32, #tpu.memory_space<vmem>>, %arg3: memref<32x16xf32, #tpu.memory_space<vmem>>, %arg4: memref<24x12xf32, #tpu.memory_space<vmem>>, %arg5: memref<8x256xf32, #tpu.memory_space<vmem>>) attributes {dimension_semantics = [], scalar_prefetch = 0 : i64, scratch_operands = 0 : i64, tpu.core_type = #tpu.core_type<tc>} {
    %c0 = arith.constant 0 : index
    %c0_0 = arith.constant 0 : index
    %0 = vector.load %arg0[%c0, %c0_0] : memref<8x32xf32, #tpu.memory_space<vmem>>, vector<8x32xf32>
    %c0_1 = arith.constant 0 : index
    %c0_2 = arith.constant 0 : index
    %1 = vector.load %arg1[%c0_1, %c0_2] : memref<208x128xf32, #tpu.memory_space<vmem>>, vector<32x64xf32>
    %cst = arith.constant dense<0.000000e+00> : vector<8x64xf32>
    %2 = tpu.matmul %0, %1, %cst {dimension_numbers = #tpu.dot_dimension_numbers<[1], [0], [0], [1], [0, 0, 1, 1], [], []>} : vector<8x32xf32>, vector<32x64xf32>, vector<8x64xf32> -> vector<8x64xf32>
    %c32 = arith.constant 32 : index
    %c0_3 = arith.constant 0 : index
    %3 = vector.load %arg1[%c32, %c0_3] : memref<208x128xf32, #tpu.memory_space<vmem>>, vector<1x64xf32>
    %4 = vector.broadcast %3 : vector<1x64xf32> to vector<8x64xf32>
    %5 = arith.addf %2, %4 : vector<8x64xf32>
    %cst_4 = arith.constant 0.000000e+00 : f32
    %6 = vector.broadcast %cst_4 : f32 to vector<8x64xf32>
    %7 = arith.maximumf %5, %6 : vector<8x64xf32>
    %c40 = arith.constant 40 : index
    %c0_5 = arith.constant 0 : index
    %8 = vector.load %arg1[%c40, %c0_5] : memref<208x128xf32, #tpu.memory_space<vmem>>, vector<64x9xf32>
    %cst_6 = arith.constant dense<0.000000e+00> : vector<8x9xf32>
    %9 = tpu.matmul %7, %8, %cst_6 {dimension_numbers = #tpu.dot_dimension_numbers<[1], [0], [0], [1], [0, 0, 1, 1], [], []>} : vector<8x64xf32>, vector<64x9xf32>, vector<8x9xf32> -> vector<8x9xf32>
    %c104 = arith.constant 104 : index
    %c0_7 = arith.constant 0 : index
    %10 = vector.load %arg1[%c104, %c0_7] : memref<208x128xf32, #tpu.memory_space<vmem>>, vector<1x9xf32>
    %11 = vector.broadcast %10 : vector<1x9xf32> to vector<8x9xf32>
    %12 = arith.addf %9, %11 : vector<8x9xf32>
    %13 = vector.extract_strided_slice %12 {offsets = [0, 1], sizes = [8, 8], strides = [1, 1]} : vector<8x9xf32> to vector<8x8xf32>
    %cst_8 = arith.constant dense<0xFF800000> : vector<8xf32>
    %14 = vector.multi_reduction <maximumf>, %13, %cst_8 [1] : vector<8x8xf32> to vector<8xf32>
    %15 = vector.shape_cast %14 : vector<8xf32> to vector<8x1xf32>
    %16 = vector.broadcast %15 : vector<8x1xf32> to vector<8x8xf32>
    %17 = arith.subf %13, %16 : vector<8x8xf32>
    %18 = math.exp %17 : vector<8x8xf32>
    %cst_9 = arith.constant dense<0.000000e+00> : vector<8xf32>
    %19 = vector.multi_reduction <add>, %18, %cst_9 [1] : vector<8x8xf32> to vector<8xf32>
    %20 = vector.shape_cast %19 : vector<8xf32> to vector<8x1xf32>
    %21 = vector.broadcast %20 : vector<8x1xf32> to vector<8x8xf32>
    %22 = arith.divf %18, %21 : vector<8x8xf32>
    %c112 = arith.constant 112 : index
    %c0_10 = arith.constant 0 : index
    %23 = vector.load %arg1[%c112, %c0_10] : memref<208x128xf32, #tpu.memory_space<vmem>>, vector<8x96xf32>
    %cst_11 = arith.constant dense<0.000000e+00> : vector<8x96xf32>
    %24 = tpu.matmul %22, %23, %cst_11 {dimension_numbers = #tpu.dot_dimension_numbers<[1], [0], [0], [1], [0, 0, 1, 1], [], []>} : vector<8x8xf32>, vector<8x96xf32>, vector<8x96xf32> -> vector<8x96xf32>
    %c120 = arith.constant 120 : index
    %c0_12 = arith.constant 0 : index
    %25 = vector.load %arg1[%c120, %c0_12] : memref<208x128xf32, #tpu.memory_space<vmem>>, vector<1x96xf32>
    %26 = vector.broadcast %25 : vector<1x96xf32> to vector<8x96xf32>
    %27 = arith.addf %24, %26 : vector<8x96xf32>
    %c0_13 = arith.constant 0 : index
    %c0_14 = arith.constant 0 : index
    %28 = vector.load %arg2[%c0_13, %c0_14] : memref<80x24xf32, #tpu.memory_space<vmem>>, vector<80x24xf32>
    %c128 = arith.constant 128 : index
    %c0_15 = arith.constant 0 : index
    %29 = vector.load %arg1[%c128, %c0_15] : memref<208x128xf32, #tpu.memory_space<vmem>>, vector<24x32xf32>
    %cst_16 = arith.constant dense<0.000000e+00> : vector<80x32xf32>
    %30 = tpu.matmul %28, %29, %cst_16 {dimension_numbers = #tpu.dot_dimension_numbers<[1], [0], [0], [1], [0, 0, 1, 1], [], []>} : vector<80x24xf32>, vector<24x32xf32>, vector<80x32xf32> -> vector<80x32xf32>
    %c152 = arith.constant 152 : index
    %c0_17 = arith.constant 0 : index
    %31 = vector.load %arg1[%c152, %c0_17] : memref<208x128xf32, #tpu.memory_space<vmem>>, vector<1x32xf32>
    %32 = vector.broadcast %31 : vector<1x32xf32> to vector<80x32xf32>
    %33 = arith.addf %30, %32 : vector<80x32xf32>
    %34 = vector.shape_cast %33 : vector<80x32xf32> to vector<1x80x32xf32>
    %cst_18 = arith.constant dense<0.000000e+00> : vector<1xf32>
    %35 = vector.multi_reduction <add>, %34, %cst_18 [1, 2] : vector<1x80x32xf32> to vector<1xf32>
    %36 = vector.shape_cast %35 : vector<1xf32> to vector<1x1x1xf32>
    %37 = vector.extract %36[0, 0, 0] : f32 from vector<1x1x1xf32>
    %38 = arith.mulf %33, %33 : vector<80x32xf32>
    %39 = vector.shape_cast %38 : vector<80x32xf32> to vector<1x80x32xf32>
    %cst_19 = arith.constant dense<0.000000e+00> : vector<1xf32>
    %40 = vector.multi_reduction <add>, %39, %cst_19 [1, 2] : vector<1x80x32xf32> to vector<1xf32>
    %41 = vector.shape_cast %40 : vector<1xf32> to vector<1x1x1xf32>
    %42 = vector.extract %41[0, 0, 0] : f32 from vector<1x1x1xf32>
    %cst_20 = arith.constant 3.906250e-04 : f32
    %43 = arith.mulf %37, %cst_20 : f32
    %cst_21 = arith.constant 2.560000e+03 : f32
    %44 = arith.mulf %cst_21, %43 : f32
    %45 = arith.mulf %44, %43 : f32
    %46 = arith.subf %42, %45 : f32
    %cst_22 = arith.constant 3.90777655E-4 : f32
    %47 = arith.mulf %46, %cst_22 : f32
    %48 = math.sqrt %47 : f32
    %cst_23 = arith.constant 9.99999993E-9 : f32
    %49 = arith.addf %48, %cst_23 : f32
    %cst_24 = arith.constant 1.000000e+00 : f32
    %50 = arith.divf %cst_24, %49 : f32
    %51 = vector.extract_strided_slice %27 {offsets = [0, 0], sizes = [8, 32], strides = [1, 1]} : vector<8x96xf32> to vector<8x32xf32>
    %52 = arith.addf %51, %0 : vector<8x32xf32>
    %cst_25 = arith.constant dense<0.000000e+00> : vector<8xf32>
    %53 = vector.multi_reduction <add>, %52, %cst_25 [1] : vector<8x32xf32> to vector<8xf32>
    %54 = vector.shape_cast %53 : vector<8xf32> to vector<8x1xf32>
    %cst_26 = arith.constant dense<0.000000e+00> : vector<8x80xf32>
    %55 = tpu.matmul %52, %33, %cst_26 {dimension_numbers = #tpu.dot_dimension_numbers<[1], [1], [0], [0], [0, 0, 1, 0], [], []>} : vector<8x32xf32>, vector<80x32xf32>, vector<8x80xf32> -> vector<8x80xf32>
    %56 = vector.broadcast %43 : f32 to vector<8x1xf32>
    %57 = arith.mulf %56, %54 : vector<8x1xf32>
    %58 = vector.broadcast %57 : vector<8x1xf32> to vector<8x80xf32>
    %59 = arith.subf %55, %58 : vector<8x80xf32>
    %60 = vector.broadcast %50 : f32 to vector<8x80xf32>
    %61 = arith.mulf %59, %60 : vector<8x80xf32>
    %c0_27 = arith.constant 0 : index
    %c0_28 = arith.constant 0 : index
    %62 = vector.load %arg3[%c0_27, %c0_28] : memref<32x16xf32, #tpu.memory_space<vmem>>, vector<32x16xf32>
    %c160 = arith.constant 160 : index
    %c0_29 = arith.constant 0 : index
    %63 = vector.load %arg1[%c160, %c0_29] : memref<208x128xf32, #tpu.memory_space<vmem>>, vector<16x32xf32>
    %cst_30 = arith.constant dense<0.000000e+00> : vector<32x32xf32>
    %64 = tpu.matmul %62, %63, %cst_30 {dimension_numbers = #tpu.dot_dimension_numbers<[1], [0], [0], [1], [0, 0, 1, 1], [], []>} : vector<32x16xf32>, vector<16x32xf32>, vector<32x32xf32> -> vector<32x32xf32>
    %c176 = arith.constant 176 : index
    %c0_31 = arith.constant 0 : index
    %65 = vector.load %arg1[%c176, %c0_31] : memref<208x128xf32, #tpu.memory_space<vmem>>, vector<1x32xf32>
    %66 = vector.broadcast %65 : vector<1x32xf32> to vector<32x32xf32>
    %67 = arith.addf %64, %66 : vector<32x32xf32>
    %68 = vector.shape_cast %67 : vector<32x32xf32> to vector<1x32x32xf32>
    %cst_32 = arith.constant dense<0.000000e+00> : vector<1xf32>
    %69 = vector.multi_reduction <add>, %68, %cst_32 [1, 2] : vector<1x32x32xf32> to vector<1xf32>
    %70 = vector.shape_cast %69 : vector<1xf32> to vector<1x1x1xf32>
    %71 = vector.extract %70[0, 0, 0] : f32 from vector<1x1x1xf32>
    %72 = arith.mulf %67, %67 : vector<32x32xf32>
    %73 = vector.shape_cast %72 : vector<32x32xf32> to vector<1x32x32xf32>
    %cst_33 = arith.constant dense<0.000000e+00> : vector<1xf32>
    %74 = vector.multi_reduction <add>, %73, %cst_33 [1, 2] : vector<1x32x32xf32> to vector<1xf32>
    %75 = vector.shape_cast %74 : vector<1xf32> to vector<1x1x1xf32>
    %76 = vector.extract %75[0, 0, 0] : f32 from vector<1x1x1xf32>
    %cst_34 = arith.constant 9.765625E-4 : f32
    %77 = arith.mulf %71, %cst_34 : f32
    %cst_35 = arith.constant 1.024000e+03 : f32
    %78 = arith.mulf %cst_35, %77 : f32
    %79 = arith.mulf %78, %77 : f32
    %80 = arith.subf %76, %79 : f32
    %cst_36 = arith.constant 9.77517105E-4 : f32
    %81 = arith.mulf %80, %cst_36 : f32
    %82 = math.sqrt %81 : f32
    %cst_37 = arith.constant 9.99999993E-9 : f32
    %83 = arith.addf %82, %cst_37 : f32
    %cst_38 = arith.constant 1.000000e+00 : f32
    %84 = arith.divf %cst_38, %83 : f32
    %85 = vector.extract_strided_slice %27 {offsets = [0, 32], sizes = [8, 32], strides = [1, 1]} : vector<8x96xf32> to vector<8x32xf32>
    %86 = arith.addf %85, %0 : vector<8x32xf32>
    %cst_39 = arith.constant dense<0.000000e+00> : vector<8xf32>
    %87 = vector.multi_reduction <add>, %86, %cst_39 [1] : vector<8x32xf32> to vector<8xf32>
    %88 = vector.shape_cast %87 : vector<8xf32> to vector<8x1xf32>
    %cst_40 = arith.constant dense<0.000000e+00> : vector<8x32xf32>
    %89 = tpu.matmul %86, %67, %cst_40 {dimension_numbers = #tpu.dot_dimension_numbers<[1], [1], [0], [0], [0, 0, 1, 0], [], []>} : vector<8x32xf32>, vector<32x32xf32>, vector<8x32xf32> -> vector<8x32xf32>
    %90 = vector.broadcast %77 : f32 to vector<8x1xf32>
    %91 = arith.mulf %90, %88 : vector<8x1xf32>
    %92 = vector.broadcast %91 : vector<8x1xf32> to vector<8x32xf32>
    %93 = arith.subf %89, %92 : vector<8x32xf32>
    %94 = vector.broadcast %84 : f32 to vector<8x32xf32>
    %95 = arith.mulf %93, %94 : vector<8x32xf32>
    %c0_41 = arith.constant 0 : index
    %c0_42 = arith.constant 0 : index
    %96 = vector.load %arg4[%c0_41, %c0_42] : memref<24x12xf32, #tpu.memory_space<vmem>>, vector<24x12xf32>
    %c184 = arith.constant 184 : index
    %c0_43 = arith.constant 0 : index
    %97 = vector.load %arg1[%c184, %c0_43] : memref<208x128xf32, #tpu.memory_space<vmem>>, vector<12x32xf32>
    %cst_44 = arith.constant dense<0.000000e+00> : vector<24x32xf32>
    %98 = tpu.matmul %96, %97, %cst_44 {dimension_numbers = #tpu.dot_dimension_numbers<[1], [0], [0], [1], [0, 0, 1, 1], [], []>} : vector<24x12xf32>, vector<12x32xf32>, vector<24x32xf32> -> vector<24x32xf32>
    %c200 = arith.constant 200 : index
    %c0_45 = arith.constant 0 : index
    %99 = vector.load %arg1[%c200, %c0_45] : memref<208x128xf32, #tpu.memory_space<vmem>>, vector<1x32xf32>
    %100 = vector.broadcast %99 : vector<1x32xf32> to vector<24x32xf32>
    %101 = arith.addf %98, %100 : vector<24x32xf32>
    %102 = vector.shape_cast %101 : vector<24x32xf32> to vector<1x24x32xf32>
    %cst_46 = arith.constant dense<0.000000e+00> : vector<1xf32>
    %103 = vector.multi_reduction <add>, %102, %cst_46 [1, 2] : vector<1x24x32xf32> to vector<1xf32>
    %104 = vector.shape_cast %103 : vector<1xf32> to vector<1x1x1xf32>
    %105 = vector.extract %104[0, 0, 0] : f32 from vector<1x1x1xf32>
    %106 = arith.mulf %101, %101 : vector<24x32xf32>
    %107 = vector.shape_cast %106 : vector<24x32xf32> to vector<1x24x32xf32>
    %cst_47 = arith.constant dense<0.000000e+00> : vector<1xf32>
    %108 = vector.multi_reduction <add>, %107, %cst_47 [1, 2] : vector<1x24x32xf32> to vector<1xf32>
    %109 = vector.shape_cast %108 : vector<1xf32> to vector<1x1x1xf32>
    %110 = vector.extract %109[0, 0, 0] : f32 from vector<1x1x1xf32>
    %cst_48 = arith.constant 0.00130208337 : f32
    %111 = arith.mulf %105, %cst_48 : f32
    %cst_49 = arith.constant 7.680000e+02 : f32
    %112 = arith.mulf %cst_49, %111 : f32
    %113 = arith.mulf %112, %111 : f32
    %114 = arith.subf %110, %113 : f32
    %cst_50 = arith.constant 0.00130378094 : f32
    %115 = arith.mulf %114, %cst_50 : f32
    %116 = math.sqrt %115 : f32
    %cst_51 = arith.constant 9.99999993E-9 : f32
    %117 = arith.addf %116, %cst_51 : f32
    %cst_52 = arith.constant 1.000000e+00 : f32
    %118 = arith.divf %cst_52, %117 : f32
    %119 = vector.extract_strided_slice %27 {offsets = [0, 64], sizes = [8, 32], strides = [1, 1]} : vector<8x96xf32> to vector<8x32xf32>
    %120 = arith.addf %119, %0 : vector<8x32xf32>
    %cst_53 = arith.constant dense<0.000000e+00> : vector<8xf32>
    %121 = vector.multi_reduction <add>, %120, %cst_53 [1] : vector<8x32xf32> to vector<8xf32>
    %122 = vector.shape_cast %121 : vector<8xf32> to vector<8x1xf32>
    %cst_54 = arith.constant dense<0.000000e+00> : vector<8x24xf32>
    %123 = tpu.matmul %120, %101, %cst_54 {dimension_numbers = #tpu.dot_dimension_numbers<[1], [1], [0], [0], [0, 0, 1, 0], [], []>} : vector<8x32xf32>, vector<24x32xf32>, vector<8x24xf32> -> vector<8x24xf32>
    %124 = vector.broadcast %111 : f32 to vector<8x1xf32>
    %125 = arith.mulf %124, %122 : vector<8x1xf32>
    %126 = vector.broadcast %125 : vector<8x1xf32> to vector<8x24xf32>
    %127 = arith.subf %123, %126 : vector<8x24xf32>
    %128 = vector.broadcast %118 : f32 to vector<8x24xf32>
    %129 = arith.mulf %127, %128 : vector<8x24xf32>
    %cst_55 = arith.constant 0.000000e+00 : f32
    %130 = vector.broadcast %cst_55 : f32 to vector<8x111xf32>
    %131 = tpu.concatenate %12, %61, %95, %129, %130 in 1 : vector<8x9xf32>, vector<8x80xf32>, vector<8x32xf32>, vector<8x24xf32>, vector<8x111xf32> -> vector<8x256xf32>
    %c0_56 = arith.constant 0 : index
    %c0_57 = arith.constant 0 : index
    %132 = vector.load %arg5[%c0_56, %c0_57] : memref<8x256xf32, #tpu.memory_space<vmem>>, vector<8x256xf32>
    tpu.vector_store %arg5[%c0_56, %c0_57], %131 {strides = array<i32>} : memref<8x256xf32, #tpu.memory_space<vmem>>, vector<8x256xf32>,
    return
  }
}

</mosaic_0001>

<llo_original>
// kernel: forward.1
$region0: #{forward.1}
  #allocation0 [shape = 'u32[]', space=smem, size = 0x4, offset = 0x4, fixed_abs, tag = 'smem constant byte address 0x4 - core index']
  #allocation1 [shape = 'u32[144,128]{1,0:T(1,128)}', space=vmem, size = 0x12000, scoped, tag = 'internal scratch']
  %s0 = inlined_call_operand.vmem [shape: f32[8,32], index: 0, kind: input, shape index: {}]
  %s1 = inlined_call_operand.vmem [shape: f32[208,128], index: 1, kind: input, shape index: {}]
  %s2 = inlined_call_operand.vmem [shape: f32[80,24], index: 2, kind: input, shape index: {}]
  %s3 = inlined_call_operand.vmem [shape: f32[32,16], index: 3, kind: input, shape index: {}]
  %s4 = inlined_call_operand.vmem [shape: f32[24,12], index: 4, kind: input, shape index: {}]
  %s5 = inlined_call_operand.vmem [shape: f32[8,256], index: 5, kind: output, shape index: {}]
  %s6 = sld [smem:[#allocation0]]
  $region30: #{forward.1} parent=0
    _
  %s8 = ssub.s32 1, %s6
  %s9 = scalar_select 0, %s8, %s6
  // Predicated region
  $region2: #{forward.1} parent=0 // pred_check
    _
  $region3: #{forward.1} parent=0 // pred_check_branch
    %11 = sbr.rel (0) target = $region5
  $region4: #{forward.1} parent=0 // pred_region
    _
  $region5: #{forward.1} parent=0 // pred_fallthru
    _
  // Predicated region
  $region6: #{forward.1} parent=0 // pred_check
    _
  $region7: #{forward.1} parent=0 // pred_check_branch
    %13 = sbr.rel (0) target = $region9
  $region8: #{forward.1} parent=0 // pred_region
    _
  $region9: #{forward.1} parent=0 // pred_fallthru
    _
  // Predicated region
  $region10: #{forward.1} parent=0 // pred_check
    _
  $region11: #{forward.1} parent=0 // pred_check_branch
    %15 = sbr.rel (0) target = $region13
  $region12: #{forward.1} parent=0 // pred_region
    _
  $region13: #{forward.1} parent=0 // pred_fallthru
    _
  // Predicated region
  $region14: #{forward.1} parent=0 // pred_check
    _
  $region15: #{forward.1} parent=0 // pred_check_branch
    %17 = sbr.rel (0) target = $region17
  $region16: #{forward.1} parent=0 // pred_region
    _
  $region17: #{forward.1} parent=0 // pred_fallthru
    _
  // Predicated region
  $region18: #{forward.1} parent=0 // pred_check
    _
  $region19: #{forward.1} parent=0 // pred_check_branch
    %19 = sbr.rel (0) target = $region21
  $region20: #{forward.1} parent=0 // pred_region
    _
  $region21: #{forward.1} parent=0 // pred_fallthru
    _
  %v20 = vld [vmem:[%s0] sm:$0xff]
  %v21 = vld [vmem:[%s1] sm:$0xff]
  %v22 = vld [vmem:[%s1 + $0x8] sm:$0xff]
  %v23 = vld [vmem:[%s1 + $0x10] sm:$0xff]
  %v24 = vld [vmem:[%s1 + $0x18] sm:$0xff]
  %v25 = vld [vmem:[%s1 + $0x20] sm:$0x1]
  %v26 = vlaneseq
  %v27 = vshrl.u32 %v26, 7
  %v28 = vsub.s32 0, %v27
  %v29 = vrot.slane %v25, %v28
  %vm30 = vcmask 261120
  %v32 = vsel %vm30, %v20, 0
  %34 = vmatprep.subr.mxu0 0.0
  %35 = vmatpush1.msra.mxu0 0.0
  %36 = vmatprep.subr.mxu0 0.0
  %37 = vmatpush1.msra.mxu0 0.0
  %38 = vmatprep.subr.mxu0 0.0
  %39 = vmatpush1.msra.mxu0 0.0
  %40 = vmatprep.subr.mxu0 0.0
  %41 = vmatpush1.msra.mxu0 0.0
  %42 = vmatprep.subr.mxu0 0.0
  %43 = vmatpush1.msra.mxu0 0.0
  %44 = vmatprep.subr.mxu0 0.0
  %45 = vmatpush1.msra.mxu0 0.0
  %46 = vmatprep.subr.mxu0 0.0
  %47 = vmatpush1.msra.mxu0 0.0
  %48 = vmatprep.subr.mxu0 0.0
  %49 = vmatpush1.msra.mxu0 0.0
  %50 = vmatprep.subr.mxu0 0.0
  %51 = vmatpush1.msra.mxu0 0.0
  %52 = vmatprep.subr.mxu0 0.0
  %53 = vmatpush1.msra.mxu0 0.0
  %54 = vmatprep.subr.mxu0 0.0
  %55 = vmatpush1.msra.mxu0 0.0
  %56 = vmatprep.subr.mxu0 0.0
  %57 = vmatpush1.msra.mxu0 0.0
  %58 = vmatprep.subr.mxu0 0.0
  %59 = vmatpush1.msra.mxu0 %v24
  %60 = vmatprep.subr.mxu0 0.0
  %61 = vmatpush1.msra.mxu0 %v23
  %62 = vmatprep.subr.mxu0 0.0
  %63 = vmatpush1.msra.mxu0 %v22
  %64 = vmatprep.subr.mxu0 0.0
  %65 = vmatpush1.msra.mxu0 %v21
  %66 = vmatprep.subr.mxu0 0.0
  %67 = vmatpush2.msra.mxu0 0.0
  %68 = vmatprep.subr.mxu0 0.0
  %69 = vmatpush2.msra.mxu0 0.0
  %70 = vmatprep.subr.mxu0 0.0
  %71 = vmatpush2.msra.mxu0 0.0
  %72 = vmatprep.subr.mxu0 0.0
  %73 = vmatpush2.msra.mxu0 0.0
  %74 = vmatprep.subr.mxu0 0.0
  %75 = vmatpush2.msra.mxu0 0.0
  %76 = vmatprep.subr.mxu0 0.0
  %77 = vmatpush2.msra.mxu0 0.0
  %78 = vmatprep.subr.mxu0 0.0
  %79 = vmatpush2.msra.mxu0 0.0
  %80 = vmatprep.subr.mxu0 0.0
  %81 = vmatpush2.msra.mxu0 0.0
  %82 = vmatprep.subr.mxu0 0.0
  %83 = vmatpush2.msra.mxu0 0.0
  %84 = vmatprep.subr.mxu0 0.0
  %85 = vmatpush2.msra.mxu0 0.0
  %86 = vmatprep.subr.mxu0 0.0
  %87 = vmatpush2.msra.mxu0 0.0
  %88 = vmatprep.subr.mxu0 0.0
  %89 = vmatpush2.msra.mxu0 0.0
  %90 = vmatprep.subr.mxu0 0.0
  %91 = vmatpush2.msra.mxu0 0.0
  %92 = vmatprep.subr.mxu0 0.0
  %93 = vmatpush2.msra.mxu0 0.0
  %94 = vmatprep.subr.mxu0 0.0
  %95 = vmatpush2.msra.mxu0 0.0
  %96 = vmatprep.subr.mxu0 0.0
  %97 = vmatpush2.msra.mxu0 0.0
  %98 = vmatprep.mubr.f32.mxu0 0.0
  %99 = vmatmul.mubr.f32.gmra.mxu0 %v32
  %v100 = vpop.f32.mrf.mxu0
  %v101 = vadd.f32 %v29, %v100
  %v102 = vpop.f32.mrf.mxu0
  %103 = vdwg.mxu0
  %v104 = vmax.f32 %v101, 0.0
  %v105 = vld [vmem:[%s1 + $0x28] sm:$0xff]
  %v106 = vld [vmem:[%s1 + $0x30] sm:$0xff]
  %v107 = vld [vmem:[%s1 + $0x38] sm:$0xff]
  %v108 = vld [vmem:[%s1 + $0x40] sm:$0xff]
  %v109 = vld [vmem:[%s1 + $0x48] sm:$0xff]
  %v110 = vld [vmem:[%s1 + $0x50] sm:$0xff]
  %v111 = vld [vmem:[%s1 + $0x58] sm:$0xff]
  %v112 = vld [vmem:[%s1 + $0x60] sm:$0xff]
  %v113 = vld [vmem:[%s1 + $0x68] sm:$0x1]
  %v114 = vlaneseq
  %v115 = vshrl.u32 %v114, 7
  %v116 = vsub.s32 0, %v115
  %v117 = vrot.slane %v113, %v116
  %vm118 = vcmask 523264
  %v120 = vsel %vm118, %v104, 0
  %122 = vmatprep.subr.mxu0 0.0
  %123 = vmatpush1.msra.mxu0 0.0
  %124 = vmatprep.subr.mxu0 0.0
  %125 = vmatpush1.msra.mxu0 0.0
  %126 = vmatprep.subr.mxu0 0.0
  %127 = vmatpush1.msra.mxu0 0.0
  %128 = vmatprep.subr.mxu0 0.0
  %129 = vmatpush1.msra.mxu0 0.0
  %130 = vmatprep.subr.mxu0 0.0
  %131 = vmatpush1.msra.mxu0 0.0
  %132 = vmatprep.subr.mxu0 0.0
  %133 = vmatpush1.msra.mxu0 0.0
  %134 = vmatprep.subr.mxu0 0.0
  %135 = vmatpush1.msra.mxu0 0.0
  %136 = vmatprep.subr.mxu0 0.0
  %137 = vmatpush1.msra.mxu0 0.0
  %138 = vmatprep.subr.mxu0 0.0
  %139 = vmatpush1.msra.mxu0 %v112
  %140 = vmatprep.subr.mxu0 0.0
  %141 = vmatpush1.msra.mxu0 %v111
  %142 = vmatprep.subr.mxu0 0.0
  %143 = vmatpush1.msra.mxu0 %v110
  %144 = vmatprep.subr.mxu0 0.0
  %145 = vmatpush1.msra.mxu0 %v109
  %146 = vmatprep.subr.mxu0 0.0
  %147 = vmatpush1.msra.mxu0 %v108
  %148 = vmatprep.subr.mxu0 0.0
  %149 = vmatpush1.msra.mxu0 %v107
  %150 = vmatprep.subr.mxu0 0.0
  %151 = vmatpush1.msra.mxu0 %v106
  %152 = vmatprep.subr.mxu0 0.0
  %153 = vmatpush1.msra.mxu0 %v105
  %154 = vmatprep.subr.mxu0 0.0
  %155 = vmatpush2.msra.mxu0 0.0
  %156 = vmatprep.subr.mxu0 0.0
  %157 = vmatpush2.msra.mxu0 0.0
  %158 = vmatprep.subr.mxu0 0.0
  %159 = vmatpush2.msra.mxu0 0.0
  %160 = vmatprep.subr.mxu0 0.0
  %161 = vmatpush2.msra.mxu0 0.0
  %162 = vmatprep.subr.mxu0 0.0
  %163 = vmatpush2.msra.mxu0 0.0
  %164 = vmatprep.subr.mxu0 0.0
  %165 = vmatpush2.msra.mxu0 0.0
  %166 = vmatprep.subr.mxu0 0.0
  %167 = vmatpush2.msra.mxu0 0.0
  %168 = vmatprep.subr.mxu0 0.0
  %169 = vmatpush2.msra.mxu0 0.0
  %170 = vmatprep.subr.mxu0 0.0
  %171 = vmatpush2.msra.mxu0 0.0
  %172 = vmatprep.subr.mxu0 0.0
  %173 = vmatpush2.msra.mxu0 0.0
  %174 = vmatprep.subr.mxu0 0.0
  %175 = vmatpush2.msra.mxu0 0.0
  %176 = vmatprep.subr.mxu0 0.0
  %177 = vmatpush2.msra.mxu0 0.0
  %178 = vmatprep.subr.mxu0 0.0
  %179 = vmatpush2.msra.mxu0 0.0
  %180 = vmatprep.subr.mxu0 0.0
  %181 = vmatpush2.msra.mxu0 0.0
  %182 = vmatprep.subr.mxu0 0.0
  %183 = vmatpush2.msra.mxu0 0.0
  %184 = vmatprep.subr.mxu0 0.0
  %185 = vmatpush2.msra.mxu0 0.0
  %186 = vmatprep.mubr.f32.mxu0 0.0
  %187 = vmatmul.mubr.f32.gmra.mxu0 %v120
  %v188 = vpop.f32.mrf.mxu0
  %v189 = vadd.f32 %v117, %v188
  %v190 = vpop.f32.mrf.mxu0
  %191 = vdwg.mxu0
  %vm192 = vcmask 72712
  %v193 = vsel %vm192, %v189, -inf
  %194 = vmax.xlane.f32.xlu0 %v193
  %v195 = vpop.xlane.xlu0 %194
  %v196 = vsub.f32 %v189, %v195
  %v197 = vmul.f32 %v196, 1.442695
  %v198 = vpow.pop %v197
  %200 = vrot.lane.b32.xlu0 %v198, 127
  %v201 = vpop.permute.xlu0 %200
  %vm203 = vcmask 64512
  %v204 = vsel %vm203, %v201, 0.0
  %205 = vadd.xlane.f32.xlu0 %v204
  %v206 = vpop.xlane.xlu0 %205
  %v207 = vrcp.pop %v206
  %v208 = vmul.f32 %v198, %v207
  %v209 = vld [vmem:[%s1 + $0x70] sm:$0xff]
  %v210 = vld [vmem:[%s1 + $0x78] sm:$0x1]
  %v211 = vlaneseq
  %v212 = vshrl.u32 %v211, 7
  %v213 = vsub.s32 0, %v212
  %v214 = vrot.slane %v210, %v213
  %216 = vrot.lane.b32.xlu0 %v208, 127
  %v217 = vpop.permute.xlu0 %216
  %v218 = vsel %vm203, %v217, 0
  %220 = vmatprep.subr.mxu0 0.0
  %221 = vmatpush1.msra.mxu0 0.0
  %222 = vmatprep.subr.mxu0 0.0
  %223 = vmatpush1.msra.mxu0 0.0
  %224 = vmatprep.subr.mxu0 0.0
  %225 = vmatpush1.msra.mxu0 0.0
  %226 = vmatprep.subr.mxu0 0.0
  %227 = vmatpush1.msra.mxu0 0.0
  %228 = vmatprep.subr.mxu0 0.0
  %229 = vmatpush1.msra.mxu0 0.0
  %230 = vmatprep.subr.mxu0 0.0
  %231 = vmatpush1.msra.mxu0 0.0
  %232 = vmatprep.subr.mxu0 0.0
  %233 = vmatpush1.msra.mxu0 0.0
  %234 = vmatprep.subr.mxu0 0.0
  %235 = vmatpush1.msra.mxu0 0.0
  %236 = vmatprep.subr.mxu0 0.0
  %237 = vmatpush1.msra.mxu0 0.0
  %238 = vmatprep.subr.mxu0 0.0
  %239 = vmatpush1.msra.mxu0 0.0
  %240 = vmatprep.subr.mxu0 0.0
  %241 = vmatpush1.msra.mxu0 0.0
  %242 = vmatprep.subr.mxu0 0.0
  %243 = vmatpush1.msra.mxu0 0.0
  %244 = vmatprep.subr.mxu0 0.0
  %245 = vmatpush1.msra.mxu0 0.0
  %246 = vmatprep.subr.mxu0 0.0
  %247 = vmatpush1.msra.mxu0 0.0
  %248 = vmatprep.subr.mxu0 0.0
  %249 = vmatpush1.msra.mxu0 0.0
  %250 = vmatprep.subr.mxu0 0.0
  %251 = vmatpush1.msra.mxu0 %v209
  %252 = vmatprep.subr.mxu0 0.0
  %253 = vmatpush2.msra.mxu0 0.0
  %254 = vmatprep.subr.mxu0 0.0
  %255 = vmatpush2.msra.mxu0 0.0
  %256 = vmatprep.subr.mxu0 0.0
  %257 = vmatpush2.msra.mxu0 0.0
  %258 = vmatprep.subr.mxu0 0.0
  %259 = vmatpush2.msra.mxu0 0.0
  %260 = vmatprep.subr.mxu0 0.0
  %261 = vmatpush2.msra.mxu0 0.0
  %262 = vmatprep.subr.mxu0 0.0
  %263 = vmatpush2.msra.mxu0 0.0
  %264 = vmatprep.subr.mxu0 0.0
  %265 = vmatpush2.msra.mxu0 0.0
  %266 = vmatprep.subr.mxu0 0.0
  %267 = vmatpush2.msra.mxu0 0.0
  %268 = vmatprep.subr.mxu0 0.0
  %269 = vmatpush2.msra.mxu0 0.0
  %270 = vmatprep.subr.mxu0 0.0
  %271 = vmatpush2.msra.mxu0 0.0
  %272 = vmatprep.subr.mxu0 0.0
  %273 = vmatpush2.msra.mxu0 0.0
  %274 = vmatprep.subr.mxu0 0.0
  %275 = vmatpush2.msra.mxu0 0.0
  %276 = vmatprep.subr.mxu0 0.0
  %277 = vmatpush2.msra.mxu0 0.0
  %278 = vmatprep.subr.mxu0 0.0
  %279 = vmatpush2.msra.mxu0 0.0
  %280 = vmatprep.subr.mxu0 0.0
  %281 = vmatpush2.msra.mxu0 0.0
  %282 = vmatprep.subr.mxu0 0.0
  %283 = vmatpush2.msra.mxu0 0.0
  %284 = vmatprep.mubr.f32.mxu0 0.0
  %285 = vmatmul.mubr.f32.gmra.mxu0 %v218
  %v286 = vpop.f32.mrf.mxu0
  %v287 = vadd.f32 %v214, %v286
  %v288 = vpop.f32.mrf.mxu0
  %289 = vdwg.mxu0
  %v290 = vld [vmem:[%s2] sm:$0xff]
  %v291 = vld [vmem:[%s2 + $0x8] sm:$0xff]
  %v292 = vld [vmem:[%s2 + $0x10] sm:$0xff]
  %v293 = vld [vmem:[%s2 + $0x18] sm:$0xff]
  %v294 = vld [vmem:[%s2 + $0x20] sm:$0xff]
  %v295 = vld [vmem:[%s2 + $0x28] sm:$0xff]
  %v296 = vld [vmem:[%s2 + $0x30] sm:$0xff]
  %v297 = vld [vmem:[%s2 + $0x38] sm:$0xff]
  %v298 = vld [vmem:[%s2 + $0x40] sm:$0xff]
  %v299 = vld [vmem:[%s2 + $0x48] sm:$0xff]
  %v300 = vld [vmem:[%s1 + $0x80] sm:$0xff]
  %v301 = vld [vmem:[%s1 + $0x88] sm:$0xff]
  %v302 = vld [vmem:[%s1 + $0x90] sm:$0xff]
  %v303 = vld [vmem:[%s1 + $0x98] sm:$0x1]
  %v304 = vlaneseq
  %v305 = vshrl.u32 %v304, 7
  %v306 = vsub.s32 0, %v305
  %v307 = vrot.slane %v303, %v306
  %vm308 = vcmask 195584
  %v310 = vsel %vm308, %v290, 0
  %v313 = vsel %vm308, %v291, 0
  %v316 = vsel %vm308, %v292, 0
  %v319 = vsel %vm308, %v293, 0
  %v322 = vsel %vm308, %v294, 0
  %v325 = vsel %vm308, %v295, 0
  %v328 = vsel %vm308, %v296, 0
  %v331 = vsel %vm308, %v297, 0
  %v334 = vsel %vm308, %v298, 0
  %v337 = vsel %vm308, %v299, 0
  %339 = vmatprep.subr.mxu0 0.0
  %340 = vmatpush1.msra.mxu0 0.0
  %341 = vmatprep.subr.mxu0 0.0
  %342 = vmatpush1.msra.mxu0 0.0
  %343 = vmatprep.subr.mxu0 0.0
  %344 = vmatpush1.msra.mxu0 0.0
  %345 = vmatprep.subr.mxu0 0.0
  %346 = vmatpush1.msra.mxu0 0.0
  %347 = vmatprep.subr.mxu0 0.0
  %348 = vmatpush1.msra.mxu0 0.0
  %349 = vmatprep.subr.mxu0 0.0
  %350 = vmatpush1.msra.mxu0 0.0
  %351 = vmatprep.subr.mxu0 0.0
  %352 = vmatpush1.msra.mxu0 0.0
  %353 = vmatprep.subr.mxu0 0.0
  %354 = vmatpush1.msra.mxu0 0.0
  %355 = vmatprep.subr.mxu0 0.0
  %356 = vmatpush1.msra.mxu0 0.0
  %357 = vmatprep.subr.mxu0 0.0
  %358 = vmatpush1.msra.mxu0 0.0
  %359 = vmatprep.subr.mxu0 0.0
  %360 = vmatpush1.msra.mxu0 0.0
  %361 = vmatprep.subr.mxu0 0.0
  %362 = vmatpush1.msra.mxu0 0.0
  %363 = vmatprep.subr.mxu0 0.0
  %364 = vmatpush1.msra.mxu0 0.0
  %365 = vmatprep.subr.mxu0 0.0
  %366 = vmatpush1.msra.mxu0 %v302
  %367 = vmatprep.subr.mxu0 0.0
  %368 = vmatpush1.msra.mxu0 %v301
  %369 = vmatprep.subr.mxu0 0.0
  %370 = vmatpush1.msra.mxu0 %v300
  %371 = vmatprep.subr.mxu0 0.0
  %372 = vmatpush2.msra.mxu0 0.0
  %373 = vmatprep.subr.mxu0 0.0
  %374 = vmatpush2.msra.mxu0 0.0
  %375 = vmatprep.subr.mxu0 0.0
  %376 = vmatpush2.msra.mxu0 0.0
  %377 = vmatprep.subr.mxu0 0.0
  %378 = vmatpush2.msra.mxu0 0.0
  %379 = vmatprep.subr.mxu0 0.0
  %380 = vmatpush2.msra.mxu0 0.0
  %381 = vmatprep.subr.mxu0 0.0
  %382 = vmatpush2.msra.mxu0 0.0
  %383 = vmatprep.subr.mxu0 0.0
  %384 = vmatpush2.msra.mxu0 0.0
  %385 = vmatprep.subr.mxu0 0.0
  %386 = vmatpush2.msra.mxu0 0.0
  %387 = vmatprep.subr.mxu0 0.0
  %388 = vmatpush2.msra.mxu0 0.0
  %389 = vmatprep.subr.mxu0 0.0
  %390 = vmatpush2.msra.mxu0 0.0
  %391 = vmatprep.subr.mxu0 0.0
  %392 = vmatpush2.msra.mxu0 0.0
  %393 = vmatprep.subr.mxu0 0.0
  %394 = vmatpush2.msra.mxu0 0.0
  %395 = vmatprep.subr.mxu0 0.0
  %396 = vmatpush2.msra.mxu0 0.0
  %397 = vmatprep.subr.mxu0 0.0
  %398 = vmatpush2.msra.mxu0 0.0
  %399 = vmatprep.subr.mxu0 0.0
  %400 = vmatpush2.msra.mxu0 0.0
  %401 = vmatprep.subr.mxu0 0.0
  %402 = vmatpush2.msra.mxu0 0.0
  %403 = vmatprep.mubr.f32.mxu0 0.0
  %404 = vmatmul.mubr.f32.gmra.mxu0 %v310
  %v405 = vpop.f32.mrf.mxu0
  %v406 = vadd.f32 %v307, %v405
  %v407 = vpop.f32.mrf.mxu0
  %408 = vmatprep.mubr.f32.mxu0 0.0
  %409 = vmatmul.mubr.f32.gmra.mxu0 %v313
  %v410 = vpop.f32.mrf.mxu0
  %v411 = vadd.f32 %v307, %v410
  %v412 = vpop.f32.mrf.mxu0
  %413 = vmatprep.mubr.f32.mxu0 0.0
  %414 = vmatmul.mubr.f32.gmra.mxu0 %v316
  %v415 = vpop.f32.mrf.mxu0
  %v416 = vadd.f32 %v307, %v415
  %v417 = vpop.f32.mrf.mxu0
  %418 = vmatprep.mubr.f32.mxu0 0.0
  %419 = vmatmul.mubr.f32.gmra.mxu0 %v319
  %v420 = vpop.f32.mrf.mxu0
  %v421 = vadd.f32 %v307, %v420
  %v422 = vpop.f32.mrf.mxu0
  %423 = vmatprep.mubr.f32.mxu0 0.0
  %424 = vmatmul.mubr.f32.gmra.mxu0 %v322
  %v425 = vpop.f32.mrf.mxu0
  %v426 = vadd.f32 %v307, %v425
  %v427 = vpop.f32.mrf.mxu0
  %428 = vmatprep.mubr.f32.mxu0 0.0
  %429 = vmatmul.mubr.f32.gmra.mxu0 %v325
  %v430 = vpop.f32.mrf.mxu0
  %v431 = vadd.f32 %v307, %v430
  %v432 = vpop.f32.mrf.mxu0
  %433 = vmatprep.mubr.f32.mxu0 0.0
  %434 = vmatmul.mubr.f32.gmra.mxu0 %v328
  %v435 = vpop.f32.mrf.mxu0
  %v436 = vadd.f32 %v307, %v435
  %v437 = vpop.f32.mrf.mxu0
  %438 = vmatprep.mubr.f32.mxu0 0.0
  %439 = vmatmul.mubr.f32.gmra.mxu0 %v331
  %v440 = vpop.f32.mrf.mxu0
  %v441 = vadd.f32 %v307, %v440
  %v442 = vpop.f32.mrf.mxu0
  %443 = vmatprep.mubr.f32.mxu0 0.0
  %444 = vmatmul.mubr.f32.gmra.mxu0 %v334
  %v445 = vpop.f32.mrf.mxu0
  %v446 = vadd.f32 %v307, %v445
  %v447 = vpop.f32.mrf.mxu0
  %448 = vmatprep.mubr.f32.mxu0 0.0
  %449 = vmatmul.mubr.f32.gmra.mxu0 %v337
  %v450 = vpop.f32.mrf.mxu0
  %v451 = vadd.f32 %v307, %v450
  %v452 = vpop.f32.mrf.mxu0
  %453 = vdwg.mxu0
  %v454 = vsel %vm30, %v406, 0.0
  %v455 = vsel %vm30, %v411, 0.0
  %v456 = vadd.f32 %v454, %v455
  %v457 = vsel %vm30, %v416, 0.0
  %v458 = vadd.f32 %v456, %v457
  %v459 = vsel %vm30, %v421, 0.0
  %v460 = vadd.f32 %v458, %v459
  %v461 = vsel %vm30, %v426, 0.0
  %v462 = vadd.f32 %v460, %v461
  %v463 = vsel %vm30, %v431, 0.0
  %v464 = vadd.f32 %v462, %v463
  %v465 = vsel %vm30, %v436, 0.0
  %v466 = vadd.f32 %v464, %v465
  %v467 = vsel %vm30, %v441, 0.0
  %v468 = vadd.f32 %v466, %v467
  %v469 = vsel %vm30, %v446, 0.0
  %v470 = vadd.f32 %v468, %v469
  %v471 = vsel %vm30, %v451, 0.0
  %v472 = vadd.f32 %v470, %v471
  %473 = vadd.xlane.f32.xlu0 %v472
  %v474 = vpop.xlane.xlu0 %473
  %v475 = vrot.slane %v474, 4
  %v476 = vadd.f32 %v474, %v475
  %v477 = vrot.slane %v476, 2
  %v478 = vadd.f32 %v476, %v477
  %v479 = vrot.slane %v478, 1
  %v480 = vadd.f32 %v478, %v479
  %s481 = vtos %v480
  %v482 = vmul.f32 %v406, %v406
  %v483 = vmul.f32 %v411, %v411
  %v484 = vmul.f32 %v416, %v416
  %v485 = vmul.f32 %v421, %v421
  %v486 = vmul.f32 %v426, %v426
  %v487 = vmul.f32 %v431, %v431
  %v488 = vmul.f32 %v436, %v436
  %v489 = vmul.f32 %v441, %v441
  %v490 = vmul.f32 %v446, %v446
  %v491 = vmul.f32 %v451, %v451
  %v492 = vsel %vm30, %v482, 0.0
  %v493 = vsel %vm30, %v483, 0.0
  %v494 = vadd.f32 %v492, %v493
  %v495 = vsel %vm30, %v484, 0.0
  %v496 = vadd.f32 %v494, %v495
  %v497 = vsel %vm30, %v485, 0.0
  %v498 = vadd.f32 %v496, %v497
  %v499 = vsel %vm30, %v486, 0.0
  %v500 = vadd.f32 %v498, %v499
  %v501 = vsel %vm30, %v487, 0.0
  %v502 = vadd.f32 %v500, %v501
  %v503 = vsel %vm30, %v488, 0.0
  %v504 = vadd.f32 %v502, %v503
  %v505 = vsel %vm30, %v489, 0.0
  %v506 = vadd.f32 %v504, %v505
  %v507 = vsel %vm30, %v490, 0.0
  %v508 = vadd.f32 %v506, %v507
  %v509 = vsel %vm30, %v491, 0.0
  %v510 = vadd.f32 %v508, %v509
  %511 = vadd.xlane.f32.xlu0 %v510
  %v512 = vpop.xlane.xlu0 %511
  %v513 = vrot.slane %v512, 4
  %v514 = vadd.f32 %v512, %v513
  %v515 = vrot.slane %v514, 2
  %v516 = vadd.f32 %v514, %v515
  %v517 = vrot.slane %v516, 1
  %v518 = vadd.f32 %v516, %v517
  %s519 = vtos %v518
  %s520 = smul.f32 %s481, 0.000390625
  %s521 = smul.f32 %s520, 2560.0
  %s522 = smul.f32 %s521, %s520
  %s523 = ssub.f32 %s519, %s522
  %s524 = smul.f32 %s523, 0.00039077766
  %v525 = vstv %s524
  %v526 = vrsqrt.pop %v525
  %v527 = vmul.f32 %v525, %v526
  %vm528 = vcmp.eq.f32.partialorder %v525, inf
  %v529 = vsel %vm528, %v525, %v527
  %vm530 = vcmp.eq.f32.partialorder %v525, 0.0
  %v531 = vand.u32 %v525, 2147483648
  %v532 = vsel %vm530, %v531, %v529
  %s533 = vtos %v532
  %s534 = sadd.f32 %s533, 1e-08
  %v535 = vstv %s534
  %v536 = vrcp.pop %v535
  %s537 = vtos %v536
  %v538 = vadd.f32 %v287, %v20
  %v539 = vsel %vm30, %v538, 0.0
  %540 = vadd.xlane.f32.xlu0 %v539
  %v541 = vpop.xlane.xlu0 %540
  %v543 = vsel %vm30, %v538, 0
  %v546 = vsel %vm30, %v406, 0
  %v549 = vsel %vm30, %v411, 0
  %v552 = vsel %vm30, %v416, 0
  %v555 = vsel %vm30, %v421, 0
  %v558 = vsel %vm30, %v426, 0
  %v561 = vsel %vm30, %v431, 0
  %v564 = vsel %vm30, %v436, 0
  %v567 = vsel %vm30, %v441, 0
  %v570 = vsel %vm30, %v446, 0
  %v573 = vsel %vm30, %v451, 0
  %575 = vmatprep.subr.mxu0 0.0
  %576 = vmatpush1.xpose.msra.mxu0 0.0
  %577 = vmatprep.subr.mxu0 0.0
  %578 = vmatpush1.xpose.msra.mxu0 0.0
  %579 = vmatprep.subr.mxu0 0.0
  %580 = vmatpush1.xpose.msra.mxu0 0.0
  %581 = vmatprep.subr.mxu0 0.0
  %582 = vmatpush1.xpose.msra.mxu0 0.0
  %583 = vmatprep.subr.mxu0 0.0
  %584 = vmatpush1.xpose.msra.mxu0 0.0
  %585 = vmatprep.subr.mxu0 0.0
  %586 = vmatpush1.xpose.msra.mxu0 0.0
  %587 = vmatprep.subr.mxu0 0.0
  %588 = vmatpush1.xpose.msra.mxu0 %v573
  %589 = vmatprep.subr.mxu0 0.0
  %590 = vmatpush1.xpose.msra.mxu0 %v570
  %591 = vmatprep.subr.mxu0 0.0
  %592 = vmatpush1.xpose.msra.mxu0 %v567
  %593 = vmatprep.subr.mxu0 0.0
  %594 = vmatpush1.xpose.msra.mxu0 %v564
  %595 = vmatprep.subr.mxu0 0.0
  %596 = vmatpush1.xpose.msra.mxu0 %v561
  %597 = vmatprep.subr.mxu0 0.0
  %598 = vmatpush1.xpose.msra.mxu0 %v558
  %599 = vmatprep.subr.mxu0 0.0
  %600 = vmatpush1.xpose.msra.mxu0 %v555
  %601 = vmatprep.subr.mxu0 0.0
  %602 = vmatpush1.xpose.msra.mxu0 %v552
  %603 = vmatprep.subr.mxu0 0.0
  %604 = vmatpush1.xpose.msra.mxu0 %v549
  %605 = vmatprep.subr.mxu0 0.0
  %606 = vmatpush1.xpose.msra.mxu0 %v546
  %607 = vmatprep.subr.mxu0 0.0
  %608 = vmatpush2.xpose.msra.mxu0 0.0
  %609 = vmatprep.subr.mxu0 0.0
  %610 = vmatpush2.xpose.msra.mxu0 0.0
  %611 = vmatprep.subr.mxu0 0.0
  %612 = vmatpush2.xpose.msra.mxu0 0.0
  %613 = vmatprep.subr.mxu0 0.0
  %614 = vmatpush2.xpose.msra.mxu0 0.0
  %615 = vmatprep.subr.mxu0 0.0
  %616 = vmatpush2.xpose.msra.mxu0 0.0
  %617 = vmatprep.subr.mxu0 0.0
  %618 = vmatpush2.xpose.msra.mxu0 0.0
  %619 = vmatprep.subr.mxu0 0.0
  %620 = vmatpush2.xpose.msra.mxu0 0.0
  %621 = vmatprep.subr.mxu0 0.0
  %622 = vmatpush2.xpose.msra.mxu0 0.0
  %623 = vmatprep.subr.mxu0 0.0
  %624 = vmatpush2.xpose.msra.mxu0 0.0
  %625 = vmatprep.subr.mxu0 0.0
  %626 = vmatpush2.xpose.msra.mxu0 0.0
  %627 = vmatprep.subr.mxu0 0.0
  %628 = vmatpush2.xpose.msra.mxu0 0.0
  %629 = vmatprep.subr.mxu0 0.0
  %630 = vmatpush2.xpose.msra.mxu0 0.0
  %631 = vmatprep.subr.mxu0 0.0
  %632 = vmatpush2.xpose.msra.mxu0 0.0
  %633 = vmatprep.subr.mxu0 0.0
  %634 = vmatpush2.xpose.msra.mxu0 0.0
  %635 = vmatprep.subr.mxu0 0.0
  %636 = vmatpush2.xpose.msra.mxu0 0.0
  %637 = vmatprep.subr.mxu0 0.0
  %638 = vmatpush2.xpose.msra.mxu0 0.0
  %639 = vmatprep.mubr.f32.mxu0 0.0
  %640 = vmatmul.mubr.f32.gmra.mxu0 %v543
  %v641 = vpop.f32.mrf.mxu0
  %v642 = vadd.f32 0.0, %v641
  %v643 = vpop.f32.mrf.mxu0
  %644 = vdwg.mxu0
  %v645 = vstv %s520
  %v646 = vmul.f32 %v645, %v541
  %v647 = vsub.f32 %v642, %v646
  %v648 = vstv %s537
  %v649 = vmul.f32 %v647, %v648
  %v650 = vld [vmem:[%s3] sm:$0xff]
  %v651 = vld [vmem:[%s3 + $0x8] sm:$0xff]
  %v652 = vld [vmem:[%s3 + $0x10] sm:$0xff]
  %v653 = vld [vmem:[%s3 + $0x18] sm:$0xff]
  %v654 = vld [vmem:[%s1 + $0xa0] sm:$0xff]
  %v655 = vld [vmem:[%s1 + $0xa8] sm:$0xff]
  %v656 = vld [vmem:[%s1 + $0xb0] sm:$0x1]
  %v657 = vlaneseq
  %v658 = vshrl.u32 %v657, 7
  %v659 = vsub.s32 0, %v658
  %v660 = vrot.slane %v656, %v659
  %vm661 = vcmask 130048
  %v663 = vsel %vm661, %v650, 0
  %v666 = vsel %vm661, %v651, 0
  %v669 = vsel %vm661, %v652, 0
  %v672 = vsel %vm661, %v653, 0
  %674 = vmatprep.subr.mxu0 0.0
  %675 = vmatpush1.msra.mxu0 0.0
  %676 = vmatprep.subr.mxu0 0.0
  %677 = vmatpush1.msra.mxu0 0.0
  %678 = vmatprep.subr.mxu0 0.0
  %679 = vmatpush1.msra.mxu0 0.0
  %680 = vmatprep.subr.mxu0 0.0
  %681 = vmatpush1.msra.mxu0 0.0
  %682 = vmatprep.subr.mxu0 0.0
  %683 = vmatpush1.msra.mxu0 0.0
  %684 = vmatprep.subr.mxu0 0.0
  %685 = vmatpush1.msra.mxu0 0.0
  %686 = vmatprep.subr.mxu0 0.0
  %687 = vmatpush1.msra.mxu0 0.0
  %688 = vmatprep.subr.mxu0 0.0
  %689 = vmatpush1.msra.mxu0 0.0
  %690 = vmatprep.subr.mxu0 0.0
  %691 = vmatpush1.msra.mxu0 0.0
  %692 = vmatprep.subr.mxu0 0.0
  %693 = vmatpush1.msra.mxu0 0.0
  %694 = vmatprep.subr.mxu0 0.0
  %695 = vmatpush1.msra.mxu0 0.0
  %696 = vmatprep.subr.mxu0 0.0
  %697 = vmatpush1.msra.mxu0 0.0
  %698 = vmatprep.subr.mxu0 0.0
  %699 = vmatpush1.msra.mxu0 0.0
  %700 = vmatprep.subr.mxu0 0.0
  %701 = vmatpush1.msra.mxu0 0.0
  %702 = vmatprep.subr.mxu0 0.0
  %703 = vmatpush1.msra.mxu0 %v655
  %704 = vmatprep.subr.mxu0 0.0
  %705 = vmatpush1.msra.mxu0 %v654
  %706 = vmatprep.subr.mxu0 0.0
  %707 = vmatpush2.msra.mxu0 0.0
  %708 = vmatprep.subr.mxu0 0.0
  %709 = vmatpush2.msra.mxu0 0.0
  %710 = vmatprep.subr.mxu0 0.0
  %711 = vmatpush2.msra.mxu0 0.0
  %712 = vmatprep.subr.mxu0 0.0
  %713 = vmatpush2.msra.mxu0 0.0
  %714 = vmatprep.subr.mxu0 0.0
  %715 = vmatpush2.msra.mxu0 0.0
  %716 = vmatprep.subr.mxu0 0.0
  %717 = vmatpush2.msra.mxu0 0.0
  %718 = vmatprep.subr.mxu0 0.0
  %719 = vmatpush2.msra.mxu0 0.0
  %720 = vmatprep.subr.mxu0 0.0
  %721 = vmatpush2.msra.mxu0 0.0
  %722 = vmatprep.subr.mxu0 0.0
  %723 = vmatpush2.msra.mxu0 0.0
  %724 = vmatprep.subr.mxu0 0.0
  %725 = vmatpush2.msra.mxu0 0.0
  %726 = vmatprep.subr.mxu0 0.0
  %727 = vmatpush2.msra.mxu0 0.0
  %728 = vmatprep.subr.mxu0 0.0
  %729 = vmatpush2.msra.mxu0 0.0
  %730 = vmatprep.subr.mxu0 0.0
  %731 = vmatpush2.msra.mxu0 0.0
  %732 = vmatprep.subr.mxu0 0.0
  %733 = vmatpush2.msra.mxu0 0.0
  %734 = vmatprep.subr.mxu0 0.0
  %735 = vmatpush2.msra.mxu0 0.0
  %736 = vmatprep.subr.mxu0 0.0
  %737 = vmatpush2.msra.mxu0 0.0
  %738 = vmatprep.mubr.f32.mxu0 0.0
  %739 = vmatmul.mubr.f32.gmra.mxu0 %v663
  %v740 = vpop.f32.mrf.mxu0
  %v741 = vadd.f32 %v660, %v740
  %v742 = vpop.f32.mrf.mxu0
  %743 = vmatprep.mubr.f32.mxu0 0.0
  %744 = vmatmul.mubr.f32.gmra.mxu0 %v666
  %v745 = vpop.f32.mrf.mxu0
  %v746 = vadd.f32 %v660, %v745
  %v747 = vpop.f32.mrf.mxu0
  %748 = vmatprep.mubr.f32.mxu0 0.0
  %749 = vmatmul.mubr.f32.gmra.mxu0 %v669
  %v750 = vpop.f32.mrf.mxu0
  %v751 = vadd.f32 %v660, %v750
  %v752 = vpop.f32.mrf.mxu0
  %753 = vmatprep.mubr.f32.mxu0 0.0
  %754 = vmatmul.mubr.f32.gmra.mxu0 %v672
  %v755 = vpop.f32.mrf.mxu0
  %v756 = vadd.f32 %v660, %v755
  %v757 = vpop.f32.mrf.mxu0
  %758 = vdwg.mxu0
  %v759 = vsel %vm30, %v741, 0.0
  %v760 = vsel %vm30, %v746, 0.0
  %v761 = vadd.f32 %v759, %v760
  %v762 = vsel %vm30, %v751, 0.0
  %v763 = vadd.f32 %v761, %v762
  %v764 = vsel %vm30, %v756, 0.0
  %v765 = vadd.f32 %v763, %v764
  %766 = vadd.xlane.f32.xlu0 %v765
  %v767 = vpop.xlane.xlu0 %766
  %v768 = vrot.slane %v767, 4
  %v769 = vadd.f32 %v767, %v768
  %v770 = vrot.slane %v769, 2
  %v771 = vadd.f32 %v769, %v770
  %v772 = vrot.slane %v771, 1
  %v773 = vadd.f32 %v771, %v772
  %s774 = vtos %v773
  %v775 = vmul.f32 %v741, %v741
  %v776 = vmul.f32 %v746, %v746
  %v777 = vmul.f32 %v751, %v751
  %v778 = vmul.f32 %v756, %v756
  %v779 = vsel %vm30, %v775, 0.0
  %v780 = vsel %vm30, %v776, 0.0
  %v781 = vadd.f32 %v779, %v780
  %v782 = vsel %vm30, %v777, 0.0
  %v783 = vadd.f32 %v781, %v782
  %v784 = vsel %vm30, %v778, 0.0
  %v785 = vadd.f32 %v783, %v784
  %786 = vadd.xlane.f32.xlu0 %v785
  %v787 = vpop.xlane.xlu0 %786
  %v788 = vrot.slane %v787, 4
  %v789 = vadd.f32 %v787, %v788
  %v790 = vrot.slane %v789, 2
  %v791 = vadd.f32 %v789, %v790
  %v792 = vrot.slane %v791, 1
  %v793 = vadd.f32 %v791, %v792
  %s794 = vtos %v793
  %s795 = smul.f32 %s774, 0.0009765625
  %s796 = smul.f32 %s795, 1024.0
  %s797 = smul.f32 %s796, %s795
  %s798 = ssub.f32 %s794, %s797
  %s799 = smul.f32 %s798, 0.0009775171
  %v800 = vstv %s799
  %v801 = vrsqrt.pop %v800
  %v802 = vmul.f32 %v800, %v801
  %vm803 = vcmp.eq.f32.partialorder %v800, inf
  %v804 = vsel %vm803, %v800, %v802
  %vm805 = vcmp.eq.f32.partialorder %v800, 0.0
  %v806 = vand.u32 %v800, 2147483648
  %v807 = vsel %vm805, %v806, %v804
  %s808 = vtos %v807
  %s809 = sadd.f32 %s808, 1e-08
  %v810 = vstv %s809
  %v811 = vrcp.pop %v810
  %s812 = vtos %v811
  %813 = vrot.lane.b32.xlu0 %v20, 32
  %v814 = vpop.permute.xlu0 %813
  %v816 = vadd.f32 %v287, %v814
  %818 = vrot.lane.b32.xlu0 %v816, 96
  %v819 = vpop.permute.xlu0 %818
  %v821 = vsel %vm30, %v819, 0.0
  %822 = vadd.xlane.f32.xlu0 %v821
  %v823 = vpop.xlane.xlu0 %822
  %v824 = vsel %vm30, %v819, 0
  %v827 = vsel %vm30, %v741, 0
  %v830 = vsel %vm30, %v746, 0
  %v833 = vsel %vm30, %v751, 0
  %v836 = vsel %vm30, %v756, 0
  %838 = vmatprep.subr.mxu0 0.0
  %839 = vmatpush1.xpose.msra.mxu0 0.0
  %840 = vmatprep.subr.mxu0 0.0
  %841 = vmatpush1.xpose.msra.mxu0 0.0
  %842 = vmatprep.subr.mxu0 0.0
  %843 = vmatpush1.xpose.msra.mxu0 0.0
  %844 = vmatprep.subr.mxu0 0.0
  %845 = vmatpush1.xpose.msra.mxu0 0.0
  %846 = vmatprep.subr.mxu0 0.0
  %847 = vmatpush1.xpose.msra.mxu0 0.0
  %848 = vmatprep.subr.mxu0 0.0
  %849 = vmatpush1.xpose.msra.mxu0 0.0
  %850 = vmatprep.subr.mxu0 0.0
  %851 = vmatpush1.xpose.msra.mxu0 0.0
  %852 = vmatprep.subr.mxu0 0.0
  %853 = vmatpush1.xpose.msra.mxu0 0.0
  %854 = vmatprep.subr.mxu0 0.0
  %855 = vmatpush1.xpose.msra.mxu0 0.0
  %856 = vmatprep.subr.mxu0 0.0
  %857 = vmatpush1.xpose.msra.mxu0 0.0
  %858 = vmatprep.subr.mxu0 0.0
  %859 = vmatpush1.xpose.msra.mxu0 0.0
  %860 = vmatprep.subr.mxu0 0.0
  %861 = vmatpush1.xpose.msra.mxu0 0.0
  %862 = vmatprep.subr.mxu0 0.0
  %863 = vmatpush1.xpose.msra.mxu0 %v836
  %864 = vmatprep.subr.mxu0 0.0
  %865 = vmatpush1.xpose.msra.mxu0 %v833
  %866 = vmatprep.subr.mxu0 0.0
  %867 = vmatpush1.xpose.msra.mxu0 %v830
  %868 = vmatprep.subr.mxu0 0.0
  %869 = vmatpush1.xpose.msra.mxu0 %v827
  %870 = vmatprep.subr.mxu0 0.0
  %871 = vmatpush2.xpose.msra.mxu0 0.0
  %872 = vmatprep.subr.mxu0 0.0
  %873 = vmatpush2.xpose.msra.mxu0 0.0
  %874 = vmatprep.subr.mxu0 0.0
  %875 = vmatpush2.xpose.msra.mxu0 0.0
  %876 = vmatprep.subr.mxu0 0.0
  %877 = vmatpush2.xpose.msra.mxu0 0.0
  %878 = vmatprep.subr.mxu0 0.0
  %879 = vmatpush2.xpose.msra.mxu0 0.0
  %880 = vmatprep.subr.mxu0 0.0
  %881 = vmatpush2.xpose.msra.mxu0 0.0
  %882 = vmatprep.subr.mxu0 0.0
  %883 = vmatpush2.xpose.msra.mxu0 0.0
  %884 = vmatprep.subr.mxu0 0.0
  %885 = vmatpush2.xpose.msra.mxu0 0.0
  %886 = vmatprep.subr.mxu0 0.0
  %887 = vmatpush2.xpose.msra.mxu0 0.0
  %888 = vmatprep.subr.mxu0 0.0
  %889 = vmatpush2.xpose.msra.mxu0 0.0
  %890 = vmatprep.subr.mxu0 0.0
  %891 = vmatpush2.xpose.msra.mxu0 0.0
  %892 = vmatprep.subr.mxu0 0.0
  %893 = vmatpush2.xpose.msra.mxu0 0.0
  %894 = vmatprep.subr.mxu0 0.0
  %895 = vmatpush2.xpose.msra.mxu0 0.0
  %896 = vmatprep.subr.mxu0 0.0
  %897 = vmatpush2.xpose.msra.mxu0 0.0
  %898 = vmatprep.subr.mxu0 0.0
  %899 = vmatpush2.xpose.msra.mxu0 0.0
  %900 = vmatprep.subr.mxu0 0.0
  %901 = vmatpush2.xpose.msra.mxu0 0.0
  %902 = vmatprep.mubr.f32.mxu0 0.0
  %903 = vmatmul.mubr.f32.gmra.mxu0 %v824
  %v904 = vpop.f32.mrf.mxu0
  %v905 = vadd.f32 0.0, %v904
  %v906 = vpop.f32.mrf.mxu0
  %907 = vdwg.mxu0
  %v908 = vstv %s795
  %v909 = vmul.f32 %v908, %v823
  %v910 = vsub.f32 %v905, %v909
  %v911 = vstv %s812
  %v912 = vmul.f32 %v910, %v911
  %v913 = vld [vmem:[%s4] sm:$0xff]
  %v914 = vld [vmem:[%s4 + $0x8] sm:$0xff]
  %v915 = vld [vmem:[%s4 + $0x10] sm:$0xff]
  %v916 = vld [vmem:[%s1 + $0xb8] sm:$0xff]
  %v917 = vld [vmem:[%s1 + $0xc0] sm:$0xf]
  %v918 = vld [vmem:[%s1 + $0xc8] sm:$0x1]
  %v919 = vlaneseq
  %v920 = vshrl.u32 %v919, 7
  %v921 = vsub.s32 0, %v920
  %v922 = vrot.slane %v918, %v921
  %vm923 = vcmask 97280
  %v925 = vsel %vm923, %v913, 0
  %v928 = vsel %vm923, %v914, 0
  %v931 = vsel %vm923, %v915, 0
  %vm933 = vcmask 1043456
  %v935 = vsel %vm933, %v917, 0
  %937 = vmatprep.subr.mxu0 0.0
  %938 = vmatpush1.msra.mxu0 0.0
  %939 = vmatprep.subr.mxu0 0.0
  %940 = vmatpush1.msra.mxu0 0.0
  %941 = vmatprep.subr.mxu0 0.0
  %942 = vmatpush1.msra.mxu0 0.0
  %943 = vmatprep.subr.mxu0 0.0
  %944 = vmatpush1.msra.mxu0 0.0
  %945 = vmatprep.subr.mxu0 0.0
  %946 = vmatpush1.msra.mxu0 0.0
  %947 = vmatprep.subr.mxu0 0.0
  %948 = vmatpush1.msra.mxu0 0.0
  %949 = vmatprep.subr.mxu0 0.0
  %950 = vmatpush1.msra.mxu0 0.0
  %951 = vmatprep.subr.mxu0 0.0
  %952 = vmatpush1.msra.mxu0 0.0
  %953 = vmatprep.subr.mxu0 0.0
  %954 = vmatpush1.msra.mxu0 0.0
  %955 = vmatprep.subr.mxu0 0.0
  %956 = vmatpush1.msra.mxu0 0.0
  %957 = vmatprep.subr.mxu0 0.0
  %958 = vmatpush1.msra.mxu0 0.0
  %959 = vmatprep.subr.mxu0 0.0
  %960 = vmatpush1.msra.mxu0 0.0
  %961 = vmatprep.subr.mxu0 0.0
  %962 = vmatpush1.msra.mxu0 0.0
  %963 = vmatprep.subr.mxu0 0.0
  %964 = vmatpush1.msra.mxu0 0.0
  %965 = vmatprep.subr.mxu0 0.0
  %966 = vmatpush1.msra.mxu0 %v935
  %967 = vmatprep.subr.mxu0 0.0
  %968 = vmatpush1.msra.mxu0 %v916
  %969 = vmatprep.subr.mxu0 0.0
  %970 = vmatpush2.msra.mxu0 0.0
  %971 = vmatprep.subr.mxu0 0.0
  %972 = vmatpush2.msra.mxu0 0.0
  %973 = vmatprep.subr.mxu0 0.0
  %974 = vmatpush2.msra.mxu0 0.0
  %975 = vmatprep.subr.mxu0 0.0
  %976 = vmatpush2.msra.mxu0 0.0
  %977 = vmatprep.subr.mxu0 0.0
  %978 = vmatpush2.msra.mxu0 0.0
  %979 = vmatprep.subr.mxu0 0.0
  %980 = vmatpush2.msra.mxu0 0.0
  %981 = vmatprep.subr.mxu0 0.0
  %982 = vmatpush2.msra.mxu0 0.0
  %983 = vmatprep.subr.mxu0 0.0
  %984 = vmatpush2.msra.mxu0 0.0
  %985 = vmatprep.subr.mxu0 0.0
  %986 = vmatpush2.msra.mxu0 0.0
  %987 = vmatprep.subr.mxu0 0.0
  %988 = vmatpush2.msra.mxu0 0.0
  %989 = vmatprep.subr.mxu0 0.0
  %990 = vmatpush2.msra.mxu0 0.0
  %991 = vmatprep.subr.mxu0 0.0
  %992 = vmatpush2.msra.mxu0 0.0
  %993 = vmatprep.subr.mxu0 0.0
  %994 = vmatpush2.msra.mxu0 0.0
  %995 = vmatprep.subr.mxu0 0.0
  %996 = vmatpush2.msra.mxu0 0.0
  %997 = vmatprep.subr.mxu0 0.0
  %998 = vmatpush2.msra.mxu0 0.0
  %999 = vmatprep.subr.mxu0 0.0
  %1000 = vmatpush2.msra.mxu0 0.0
  %1001 = vmatprep.mubr.f32.mxu0 0.0
  %1002 = vmatmul.mubr.f32.gmra.mxu0 %v925
  %v1003 = vpop.f32.mrf.mxu0
  %v1004 = vadd.f32 %v922, %v1003
  %v1005 = vpop.f32.mrf.mxu0
  %1006 = vmatprep.mubr.f32.mxu0 0.0
  %1007 = vmatmul.mubr.f32.gmra.mxu0 %v928
  %v1008 = vpop.f32.mrf.mxu0
  %v1009 = vadd.f32 %v922, %v1008
  %v1010 = vpop.f32.mrf.mxu0
  %1011 = vmatprep.mubr.f32.mxu0 0.0
  %1012 = vmatmul.mubr.f32.gmra.mxu0 %v931
  %v1013 = vpop.f32.mrf.mxu0
  %v1014 = vadd.f32 %v922, %v1013
  %v1015 = vpop.f32.mrf.mxu0
  %1016 = vdwg.mxu0
  %v1017 = vsel %vm30, %v1004, 0.0
  %v1018 = vsel %vm30, %v1009, 0.0
  %v1019 = vadd.f32 %v1017, %v1018
  %v1020 = vsel %vm30, %v1014, 0.0
  %v1021 = vadd.f32 %v1019, %v1020
  %1022 = vadd.xlane.f32.xlu0 %v1021
  %v1023 = vpop.xlane.xlu0 %1022
  %v1024 = vrot.slane %v1023, 4
  %v1025 = vadd.f32 %v1023, %v1024
  %v1026 = vrot.slane %v1025, 2
  %v1027 = vadd.f32 %v1025, %v1026
  %v1028 = vrot.slane %v1027, 1
  %v1029 = vadd.f32 %v1027, %v1028
  %s1030 = vtos %v1029
  %v1031 = vmul.f32 %v1004, %v1004
  %v1032 = vmul.f32 %v1009, %v1009
  %v1033 = vmul.f32 %v1014, %v1014
  %v1034 = vsel %vm30, %v1031, 0.0
  %v1035 = vsel %vm30, %v1032, 0.0
  %v1036 = vadd.f32 %v1034, %v1035
  %v1037 = vsel %vm30, %v1033, 0.0
  %v1038 = vadd.f32 %v1036, %v1037
  %1039 = vadd.xlane.f32.xlu0 %v1038
  %v1040 = vpop.xlane.xlu0 %1039
  %v1041 = vrot.slane %v1040, 4
  %v1042 = vadd.f32 %v1040, %v1041
  %v1043 = vrot.slane %v1042, 2
  %v1044 = vadd.f32 %v1042, %v1043
  %v1045 = vrot.slane %v1044, 1
  %v1046 = vadd.f32 %v1044, %v1045
  %s1047 = vtos %v1046
  %s1048 = smul.f32 %s1030, 0.0013020834
  %s1049 = smul.f32 %s1048, 768.0
  %s1050 = smul.f32 %s1049, %s1048
  %s1051 = ssub.f32 %s1047, %s1050
  %s1052 = smul.f32 %s1051, 0.0013037809
  %v1053 = vstv %s1052
  %v1054 = vrsqrt.pop %v1053
  %v1055 = vmul.f32 %v1053, %v1054
  %vm1056 = vcmp.eq.f32.partialorder %v1053, inf
  %v1057 = vsel %vm1056, %v1053, %v1055
  %vm1058 = vcmp.eq.f32.partialorder %v1053, 0.0
  %v1059 = vand.u32 %v1053, 2147483648
  %v1060 = vsel %vm1058, %v1059, %v1057
  %s1061 = vtos %v1060
  %s1062 = sadd.f32 %s1061, 1e-08
  %v1063 = vstv %s1062
  %v1064 = vrcp.pop %v1063
  %s1065 = vtos %v1064
  %1066 = vrot.lane.b32.xlu0 %v20, 64
  %v1067 = vpop.permute.xlu0 %1066
  %v1069 = vadd.f32 %v287, %v1067
  %1071 = vrot.lane.b32.xlu0 %v1069, 64
  %v1072 = vpop.permute.xlu0 %1071
  %v1074 = vsel %vm30, %v1072, 0.0
  %1075 = vadd.xlane.f32.xlu0 %v1074
  %v1076 = vpop.xlane.xlu0 %1075
  %v1077 = vsel %vm30, %v1072, 0
  %v1080 = vsel %vm30, %v1004, 0
  %v1083 = vsel %vm30, %v1009, 0
  %v1086 = vsel %vm30, %v1014, 0
  %1088 = vmatprep.subr.mxu0 0.0
  %1089 = vmatpush1.xpose.msra.mxu0 0.0
  %1090 = vmatprep.subr.mxu0 0.0
  %1091 = vmatpush1.xpose.msra.mxu0 0.0
  %1092 = vmatprep.subr.mxu0 0.0
  %1093 = vmatpush1.xpose.msra.mxu0 0.0
  %1094 = vmatprep.subr.mxu0 0.0
  %1095 = vmatpush1.xpose.msra.mxu0 0.0
  %1096 = vmatprep.subr.mxu0 0.0
  %1097 = vmatpush1.xpose.msra.mxu0 0.0
  %1098 = vmatprep.subr.mxu0 0.0
  %1099 = vmatpush1.xpose.msra.mxu0 0.0
  %1100 = vmatprep.subr.mxu0 0.0
  %1101 = vmatpush1.xpose.msra.mxu0 0.0
  %1102 = vmatprep.subr.mxu0 0.0
  %1103 = vmatpush1.xpose.msra.mxu0 0.0
  %1104 = vmatprep.subr.mxu0 0.0
  %1105 = vmatpush1.xpose.msra.mxu0 0.0
  %1106 = vmatprep.subr.mxu0 0.0
  %1107 = vmatpush1.xpose.msra.mxu0 0.0
  %1108 = vmatprep.subr.mxu0 0.0
  %1109 = vmatpush1.xpose.msra.mxu0 0.0
  %1110 = vmatprep.subr.mxu0 0.0
  %1111 = vmatpush1.xpose.msra.mxu0 0.0
  %1112 = vmatprep.subr.mxu0 0.0
  %1113 = vmatpush1.xpose.msra.mxu0 0.0
  %1114 = vmatprep.subr.mxu0 0.0
  %1115 = vmatpush1.xpose.msra.mxu0 %v1086
  %1116 = vmatprep.subr.mxu0 0.0
  %1117 = vmatpush1.xpose.msra.mxu0 %v1083
  %1118 = vmatprep.subr.mxu0 0.0
  %1119 = vmatpush1.xpose.msra.mxu0 %v1080
  %1120 = vmatprep.subr.mxu0 0.0
  %1121 = vmatpush2.xpose.msra.mxu0 0.0
  %1122 = vmatprep.subr.mxu0 0.0
  %1123 = vmatpush2.xpose.msra.mxu0 0.0
  %1124 = vmatprep.subr.mxu0 0.0
  %1125 = vmatpush2.xpose.msra.mxu0 0.0
  %1126 = vmatprep.subr.mxu0 0.0
  %1127 = vmatpush2.xpose.msra.mxu0 0.0
  %1128 = vmatprep.subr.mxu0 0.0
  %1129 = vmatpush2.xpose.msra.mxu0 0.0
  %1130 = vmatprep.subr.mxu0 0.0
  %1131 = vmatpush2.xpose.msra.mxu0 0.0
  %1132 = vmatprep.subr.mxu0 0.0
  %1133 = vmatpush2.xpose.msra.mxu0 0.0
  %1134 = vmatprep.subr.mxu0 0.0
  %1135 = vmatpush2.xpose.msra.mxu0 0.0
  %1136 = vmatprep.subr.mxu0 0.0
  %1137 = vmatpush2.xpose.msra.mxu0 0.0
  %1138 = vmatprep.subr.mxu0 0.0
  %1139 = vmatpush2.xpose.msra.mxu0 0.0
  %1140 = vmatprep.subr.mxu0 0.0
  %1141 = vmatpush2.xpose.msra.mxu0 0.0
  %1142 = vmatprep.subr.mxu0 0.0
  %1143 = vmatpush2.xpose.msra.mxu0 0.0
  %1144 = vmatprep.subr.mxu0 0.0
  %1145 = vmatpush2.xpose.msra.mxu0 0.0
  %1146 = vmatprep.subr.mxu0 0.0
  %1147 = vmatpush2.xpose.msra.mxu0 0.0
  %1148 = vmatprep.subr.mxu0 0.0
  %1149 = vmatpush2.xpose.msra.mxu0 0.0
  %1150 = vmatprep.subr.mxu0 0.0
  %1151 = vmatpush2.xpose.msra.mxu0 0.0
  %1152 = vmatprep.mubr.f32.mxu0 0.0
  %1153 = vmatmul.mubr.f32.gmra.mxu0 %v1077
  %v1154 = vpop.f32.mrf.mxu0
  %v1155 = vadd.f32 0.0, %v1154
  %v1156 = vpop.f32.mrf.mxu0
  %1157 = vdwg.mxu0
  %v1158 = vstv %s1048
  %v1159 = vmul.f32 %v1158, %v1076
  %v1160 = vsub.f32 %v1155, %v1159
  %v1161 = vstv %s1065
  %v1162 = vmul.f32 %v1160, %v1161
  %1164 = vrot.lane.b32.xlu0 %v649, 9
  %v1165 = vpop.permute.xlu0 %1164
  %1168 = vrot.lane.b32.xlu0 %v912, 89
  %v1169 = vpop.permute.xlu0 %1168
  %1172 = vrot.lane.b32.xlu0 %v1162, 121
  %v1173 = vpop.permute.xlu0 %1172
  %vm1175 = vcmask 72704
  %v1176 = vsel %vm1175, %v189, %v1165
  %vm1177 = vcmask 728064
  %v1178 = vsel %vm1177, %v1176, %v1169
  %vm1179 = vcmask 990208
  %v1180 = vsel %vm1179, %v1178, %v1173
  %vm1181 = vcmask 138240
  %v1182 = vsel %vm1181, %v1173, 0.0
  %1183 = vst [vmem:[%s5] sm:$0xff] %v1180
  %1184 = vst [vmem:[%s5 + $0x8] sm:$0xff] %v1182
  // Predicated region
  $region22: #{forward.1} parent=0 // pred_check
    _
  $region23: #{forward.1} parent=0 // pred_check_branch
    %1186 = sbr.rel (0) target = $region25
  $region24: #{forward.1} parent=0 // pred_region
    _
  $region25: #{forward.1} parent=0 // pred_fallthru
    _
  // Predicated region
  $region26: #{forward.1} parent=0 // pred_check
    _
  $region27: #{forward.1} parent=0 // pred_check_branch
    %1188 = sbr.rel (0) target = $region29
  $region28: #{forward.1} parent=0 // pred_region
    _
  $region29: #{forward.1} parent=0 // pred_fallthru
    _

</llo_original>
